<compile_context>
chip_gen: v5e
topology: v5e:2x2
jax: 0.10.0
libtpu: 0.0.40
codegen_flags: <defaults>
</compile_context>

<pallas_src>
import functools

import numpy as np

import jax
import jax.numpy as jnp
from jax.experimental import pallas as pl
from jax.experimental.pallas import tpu as pltpu


def _round_up(x: int, m: int) -> int:
    return (x + m - 1) // m * m


def _mlp_kernel(x_ref, w1_ref, b1_ref, w2_ref, b2_ref, o_ref):
    # x_ref:  (bm, E)       tile of the batch
    # w1_ref: (E, H2p)      full (padded) weight, resident across grid steps
    # b1_ref: (1, H2p)      f32
    # w2_ref: (H2p, Hp)     full (padded) weight
    # b2_ref: (1, Hp)       f32
    # o_ref:  (bm, Hp)
    x = x_ref[...]
    # First linear + ReLU; accumulate in f32 on the MXU.
    h = jnp.dot(x, w1_ref[...], preferred_element_type=jnp.float32) + b1_ref[...]
    h = jnp.maximum(h, 0.0)
    # Second linear (activation cast to weight dtype for the MXU, f32 accum).
    out = jnp.dot(h.astype(w2_ref.dtype), w2_ref[...],
                  preferred_element_type=jnp.float32) + b2_ref[...]
    o_ref[...] = out.astype(o_ref.dtype)


def _pick_block_m(requested: int, B: int, E: int, H2p: int, Hp: int,
                  itemsize: int, budget_bytes: int = 24 * 1024 * 1024) -> int:
    """Cap the batch tile so double-buffered x/out tiles, the f32 intermediate,
    and (worst-case double-buffered) weights fit comfortably in scoped VMEM on
    every generation (incl. v7x's 64 MiB physical / 32 MiB default scope)."""
    weight_bytes = 2 * (E * H2p + H2p * Hp) * itemsize + 2 * (H2p + Hp) * 4
    per_row = 2 * (E * itemsize + Hp * itemsize) + 4 * (H2p + Hp)  # tiles + f32 temps
    avail = max(budget_bytes - weight_bytes, per_row * 8)
    bm = min(requested, max(int(avail // per_row), 8))
    bm = max((bm // 8) * 8, 8)            # sublane (8) alignment
    if bm >= B:
        return B                           # full-batch block is always legal
    return bm


@functools.partial(jax.jit, static_argnames=("block_m", "compute_dtype"))
def contrastive_pretext_decoder(x, w1, b1, w2, b2, *, block_m=256,
                                compute_dtype=None):
    """x: (B, E) -> (B, H).  Tiles over the batch dimension only; the small
    projection-head weights stay fully resident in VMEM across the grid."""
    B, E = x.shape
    H2 = w1.shape[1]          # 2 * hidden_dim
    H = w2.shape[1]           # hidden_dim
    out_dtype = x.dtype
    cdt = out_dtype if compute_dtype is None else compute_dtype

    # Pad hidden dims to a multiple of 128 lanes (zero columns/rows are exact).
    H2p = _round_up(H2, 128)
    Hp = _round_up(H, 128)
    w1p = jnp.zeros((E, H2p), cdt).at[:, :H2].set(w1.astype(cdt))
    b1p = jnp.zeros((1, H2p), jnp.float32).at[:, :H2].set(
        b1.reshape(1, H2).astype(jnp.float32))
    w2p = jnp.zeros((H2p, Hp), cdt).at[:H2, :H].set(w2.astype(cdt))
    b2p = jnp.zeros((1, Hp), jnp.float32).at[:, :H].set(
        b2.reshape(1, H).astype(jnp.float32))
    xc = x.astype(cdt)

    itemsize = np.dtype(cdt).itemsize
    bm = _pick_block_m(block_m, B, E, H2p, Hp, itemsize)
    grid = (pl.cdiv(B, bm),)

    flops = 2 * B * E * H2p + 2 * B * H2p * Hp
    bytes_accessed = (B * E * itemsize                       # x
                      + B * Hp * np.dtype(out_dtype).itemsize  # out
                      + (E * H2p + H2p * Hp) * itemsize        # weights
                      + (H2p + Hp) * 4)                        # biases

    out_padded = pl.pallas_call(
        _mlp_kernel,
        out_shape=jax.ShapeDtypeStruct((B, Hp), out_dtype),
        grid_spec=pltpu.PrefetchScalarGridSpec(
            num_scalar_prefetch=0,
            grid=grid,
            in_specs=[
                pl.BlockSpec((bm, E), lambda i: (i, 0)),     # x tile
                pl.BlockSpec((E, H2p), lambda i: (0, 0)),    # W1 (constant block)
                pl.BlockSpec((1, H2p), lambda i: (0, 0)),    # b1
                pl.BlockSpec((H2p, Hp), lambda i: (0, 0)),   # W2 (constant block)
                pl.BlockSpec((1, Hp), lambda i: (0, 0)),     # b2
            ],
            out_specs=pl.BlockSpec((bm, Hp), lambda i: (i, 0)),
        ),
        compiler_params=pltpu.CompilerParams(
            dimension_semantics=("parallel",)),
        cost_estimate=pl.CostEstimate(flops=flops, transcendentals=0,
                                      bytes_accessed=bytes_accessed),
    )(xc, w1p, b1p, w2p, b2p)

    return out_padded[:, :H]


def init_params(key, embedding_dim, hidden_dim, dtype=jnp.float32):
    """Deterministic synthetic init (PyTorch-Linear-style uniform bounds)."""
    k1, k2, k3, k4 = jax.random.split(key, 4)
    bound1 = 1.0 / (embedding_dim ** 0.5)
    bound2 = 1.0 / ((2 * hidden_dim) ** 0.5)
    w1 = jax.random.uniform(k1, (embedding_dim, 2 * hidden_dim), dtype,
                            minval=-bound1, maxval=bound1)
    b1 = jax.random.uniform(k2, (1, 2 * hidden_dim), dtype,
                            minval=-bound1, maxval=bound1)
    w2 = jax.random.uniform(k3, (2 * hidden_dim, hidden_dim), dtype,
                            minval=-bound2, maxval=bound2)
    b2 = jax.random.uniform(k4, (1, hidden_dim), dtype,
                            minval=-bound2, maxval=bound2)
    return w1, b1, w2, b2


if __name__ == "__main__":
    embedding_dim = 32
    hidden_dim = 16
    batch = 16

    key = jax.random.PRNGKey(0)
    kx, kp = jax.random.split(key)
    x = jax.random.normal(kx, (batch, embedding_dim), jnp.float32)
    w1, b1, w2, b2 = init_params(kp, embedding_dim, hidden_dim)

    # Pure-JAX reference.
    ref = jnp.maximum(x @ w1 + b1, 0.0) @ w2 + b2

    # f32 path (exact vs reference).
    out = contrastive_pretext_decoder(x, w1, b1, w2, b2)
    out = jax.block_until_ready(out)
    assert out.shape == (batch, hidden_dim)
    assert jnp.allclose(out, ref, atol=1e-5, rtol=1e-5)

    # bf16 input/weight path with f32 accumulation (v6e/v7x-oriented).
    out_bf16 = contrastive_pretext_decoder(x, w1, b1, w2, b2,
                                           compute_dtype=jnp.bfloat16)
    out_bf16 = jax.block_until_ready(out_bf16)
    assert out_bf16.shape == (batch, hidden_dim)
    assert jnp.allclose(out_bf16, ref, atol=1e-1, rtol=1e-1)

    print("KERNEL_OK")
</pallas_src>

<mosaic_0001>
module attributes {stable_mosaic.version = 11 : i64} {
  func.func @_mlp_kernel(%arg0: i32, %arg1: memref<16x32xf32, #tpu.memory_space<vmem>>, %arg2: memref<32x128xf32, #tpu.memory_space<vmem>>, %arg3: memref<1x128xf32, #tpu.memory_space<vmem>>, %arg4: memref<128x128xf32, #tpu.memory_space<vmem>>, %arg5: memref<1x128xf32, #tpu.memory_space<vmem>>, %arg6: memref<16x128xf32, #tpu.memory_space<vmem>>) attributes {dimension_semantics = [#tpu.dimension_semantics<parallel>], iteration_bounds = array<i64: 1>, scalar_prefetch = 0 : i64, scratch_operands = 0 : i64, tpu.core_type = #tpu.core_type<tc>, window_params = [{transform_indices = @transform_0, window_bounds = array<i64: 16, 32>}, {pipeline_mode = #tpu.pipeline_mode<synchronous>, transform_indices = @transform_1, window_bounds = array<i64: 32, 128>}, {pipeline_mode = #tpu.pipeline_mode<synchronous>, transform_indices = @transform_2, window_bounds = array<i64: 1, 128>}, {pipeline_mode = #tpu.pipeline_mode<synchronous>, transform_indices = @transform_3, window_bounds = array<i64: 128, 128>}, {pipeline_mode = #tpu.pipeline_mode<synchronous>, transform_indices = @transform_4, window_bounds = array<i64: 1, 128>}, {transform_indices = @transform_5, window_bounds = array<i64: 16, 128>}]} {
    %c0 = arith.constant 0 : index
    %c0_0 = arith.constant 0 : index
    %0 = vector.load %arg1[%c0, %c0_0] : memref<16x32xf32, #tpu.memory_space<vmem>>, vector<16x32xf32>
    %c0_1 = arith.constant 0 : index
    %c0_2 = arith.constant 0 : index
    %1 = vector.load %arg2[%c0_1, %c0_2] : memref<32x128xf32, #tpu.memory_space<vmem>>, vector<32x128xf32>
    %cst = arith.constant dense<0.000000e+00> : vector<16x128xf32>
    %2 = tpu.matmul %0, %1, %cst {dimension_numbers = #tpu.dot_dimension_numbers<[1], [0], [0], [1], [0, 0, 1, 1], [], []>} : vector<16x32xf32>, vector<32x128xf32>, vector<16x128xf32> -> vector<16x128xf32>
    %c0_3 = arith.constant 0 : index
    %c0_4 = arith.constant 0 : index
    %3 = vector.load %arg3[%c0_3, %c0_4] : memref<1x128xf32, #tpu.memory_space<vmem>>, vector<1x128xf32>
    %4 = vector.broadcast %3 : vector<1x128xf32> to vector<16x128xf32>
    %5 = arith.addf %2, %4 : vector<16x128xf32>
    %cst_5 = arith.constant 0.000000e+00 : f32
    %6 = vector.broadcast %cst_5 : f32 to vector<16x128xf32>
    %7 = arith.maximumf %5, %6 : vector<16x128xf32>
    %c0_6 = arith.constant 0 : index
    %c0_7 = arith.constant 0 : index
    %8 = vector.load %arg4[%c0_6, %c0_7] : memref<128x128xf32, #tpu.memory_space<vmem>>, vector<128x128xf32>
    %cst_8 = arith.constant dense<0.000000e+00> : vector<16x128xf32>
    %9 = tpu.matmul %7, %8, %cst_8 {dimension_numbers = #tpu.dot_dimension_numbers<[1], [0], [0], [1], [0, 0, 1, 1], [], []>} : vector<16x128xf32>, vector<128x128xf32>, vector<16x128xf32> -> vector<16x128xf32>
    %c0_9 = arith.constant 0 : index
    %c0_10 = arith.constant 0 : index
    %10 = vector.load %arg5[%c0_9, %c0_10] : memref<1x128xf32, #tpu.memory_space<vmem>>, vector<1x128xf32>
    %11 = vector.broadcast %10 : vector<1x128xf32> to vector<16x128xf32>
    %12 = arith.addf %9, %11 : vector<16x128xf32>
    %c0_11 = arith.constant 0 : index
    %c0_12 = arith.constant 0 : index
    %13 = vector.load %arg6[%c0_11, %c0_12] : memref<16x128xf32, #tpu.memory_space<vmem>>, vector<16x128xf32>
    tpu.vector_store %arg6[%c0_11, %c0_12], %12 {strides = array<i32>} : memref<16x128xf32, #tpu.memory_space<vmem>>, vector<16x128xf32>,
    return
  }
  func.func @transform_0(%arg0: i32) -> (i32, i32) {
    %c0_i32 = arith.constant 0 : i32
    %c0_i32_0 = arith.constant 0 : i32
    return %arg0, %c0_i32 : i32, i32
  }
  func.func @transform_1(%arg0: i32) -> (i32, i32) {
    %c0_i32 = arith.constant 0 : i32
    %c0_i32_0 = arith.constant 0 : i32
    %c0_i32_1 = arith.constant 0 : i32
    return %c0_i32, %c0_i32_0 : i32, i32
  }
  func.func @transform_2(%arg0: i32) -> (i32, i32) {
    %c0_i32 = arith.constant 0 : i32
    %c0_i32_0 = arith.constant 0 : i32
    %c0_i32_1 = arith.constant 0 : i32
    return %c0_i32, %c0_i32_0 : i32, i32
  }
  func.func @transform_3(%arg0: i32) -> (i32, i32) {
    %c0_i32 = arith.constant 0 : i32
    %c0_i32_0 = arith.constant 0 : i32
    %c0_i32_1 = arith.constant 0 : i32
    return %c0_i32, %c0_i32_0 : i32, i32
  }
  func.func @transform_4(%arg0: i32) -> (i32, i32) {
    %c0_i32 = arith.constant 0 : i32
    %c0_i32_0 = arith.constant 0 : i32
    %c0_i32_1 = arith.constant 0 : i32
    return %c0_i32, %c0_i32_0 : i32, i32
  }
  func.func @transform_5(%arg0: i32) -> (i32, i32) {
    %c0_i32 = arith.constant 0 : i32
    %c0_i32_0 = arith.constant 0 : i32
    return %arg0, %c0_i32 : i32, i32
  }
}

</mosaic_0001>

<llo_original>
// kernel: contrastive_pretext_decoder.1
$region0: #{contrastive_pretext_decoder.1}
  #allocation0 [shape = 'u32[]', space=smem, size = 0x4, offset = 0x4, fixed_abs, tag = 'smem constant byte address 0x4 - core index']
  #allocation1 [shape = 'u32[72,128]{1,0:T(1,128)}', space=vmem, size = 0x9000, scoped, tag = 'internal scratch']
  %s0 = inlined_call_operand.vmem [shape: f32[16,32], index: 0, kind: input, shape index: {}]
  %s1 = inlined_call_operand.vmem [shape: f32[32,128], index: 1, kind: input, shape index: {}]
  %s2 = inlined_call_operand.vmem [shape: f32[1,128], index: 2, kind: input, shape index: {}]
  %s3 = inlined_call_operand.vmem [shape: f32[128,128], index: 3, kind: input, shape index: {}]
  %s4 = inlined_call_operand.vmem [shape: f32[1,128], index: 4, kind: input, shape index: {}]
  %s5 = inlined_call_operand.hbm [shape: f32[16,128], index: 5, kind: output, shape index: {}]
  %s6 = sld [smem:[#allocation0]]
  $region30: #{contrastive_pretext_decoder.1} parent=0
    _
  %s8 = ssub.s32 1, %s6
  %s9 = scalar_select 0, %s8, %s6
  $region1: #{contrastive_pretext_decoder.1} parent=0
    #allocation2 [shape = 'u8[8192]{0}', space=vmem, size = 0x2000, scoped, tag = 'output window, operand 0, single buffered']
    #allocation3 [shape = 's32[1]{0}', space=sflag, size = 0x4, scoped, tag = 'scoped memory for contrastive_pretext_decoder.1']
    %10 = vsyncpa [#allocation3], 0
    // Predicated region
    $region2: #{contrastive_pretext_decoder.1} parent=1 // pred_check
      _
    $region3: #{contrastive_pretext_decoder.1} parent=1 // pred_check_branch
      %12 = sbr.rel (0) target = $region5
    $region4: #{contrastive_pretext_decoder.1} parent=1 // pred_region
      _
    $region5: #{contrastive_pretext_decoder.1} parent=1 // pred_fallthru
      _
    // Predicated region
    $region6: #{contrastive_pretext_decoder.1} parent=1 // pred_check
      _
    $region7: #{contrastive_pretext_decoder.1} parent=1 // pred_check_branch
      %14 = sbr.rel (0) target = $region9
    $region8: #{contrastive_pretext_decoder.1} parent=1 // pred_region
      _
    $region9: #{contrastive_pretext_decoder.1} parent=1 // pred_fallthru
      _
    // Predicated region
    $region10: #{contrastive_pretext_decoder.1} parent=1 // pred_check
      _
    $region11: #{contrastive_pretext_decoder.1} parent=1 // pred_check_branch
      %16 = sbr.rel (0) target = $region13
    $region12: #{contrastive_pretext_decoder.1} parent=1 // pred_region
      _
    $region13: #{contrastive_pretext_decoder.1} parent=1 // pred_fallthru
      _
    // Predicated region
    $region14: #{contrastive_pretext_decoder.1} parent=1 // pred_check
      _
    $region15: #{contrastive_pretext_decoder.1} parent=1 // pred_check_branch
      %18 = sbr.rel (0) target = $region17
    $region16: #{contrastive_pretext_decoder.1} parent=1 // pred_region
      _
    $region17: #{contrastive_pretext_decoder.1} parent=1 // pred_fallthru
      _
    // Predicated region
    $region18: #{contrastive_pretext_decoder.1} parent=1 // pred_check
      _
    $region19: #{contrastive_pretext_decoder.1} parent=1 // pred_check_branch
      %20 = sbr.rel (0) target = $region21
    $region20: #{contrastive_pretext_decoder.1} parent=1 // pred_region
      _
    $region21: #{contrastive_pretext_decoder.1} parent=1 // pred_fallthru
      _
    %v21 = vld [vmem:[%s0] sm:$0xff]
    %v22 = vld [vmem:[%s0 + $0x8] sm:$0xff]
    %v23 = vld [vmem:[%s1] sm:$0xff]
    %v24 = vld [vmem:[%s1 + $0x8] sm:$0xff]
    %v25 = vld [vmem:[%s1 + $0x10] sm:$0xff]
    %v26 = vld [vmem:[%s1 + $0x18] sm:$0xff]
    %v27 = vld [vmem:[%s2] sm:$0x1]
    %v29 = vperm.slane %v27, 0
    %vm31 = vcmask 261120
    %v33 = vsel %vm31, %v21, 0
    %v36 = vsel %vm31, %v22, 0
    %38 = vmatpush.msra.mxu0 0.0
    %39 = vmatpush.msra.mxu0 0.0
    %40 = vmatpush.msra.mxu0 0.0
    %41 = vmatpush.msra.mxu0 0.0
    %42 = vmatpush.msra.mxu0 0.0
    %43 = vmatpush.msra.mxu0 0.0
    %44 = vmatpush.msra.mxu0 0.0
    %45 = vmatpush.msra.mxu0 0.0
    %46 = vmatpush.msra.mxu0 0.0
    %47 = vmatpush.msra.mxu0 0.0
    %48 = vmatpush.msra.mxu0 0.0
    %49 = vmatpush.msra.mxu0 0.0
    %50 = vmatpush.msra.mxu0 %v26
    %51 = vmatpush.msra.mxu0 %v25
    %52 = vmatpush.msra.mxu0 %v24
    %53 = vmatpush.msra.mxu0 %v23
    %54 = vmatmul.f32.gmra.mxu0 %v33
    %v55 = vpop.f32.mrf.mxu0
    %v56 = vadd.f32 %v29, %v55
    %57 = vmatmul.f32.gmra.mxu0 %v36
    %v58 = vpop.f32.mrf.mxu0
    %v59 = vadd.f32 %v29, %v58
    %60 = vdwg.mxu0
    %v61 = vmax.f32 %v56, 0.0
    %v62 = vmax.f32 %v59, 0.0
    %v63 = vld [vmem:[%s3] sm:$0xff]
    %v64 = vld [vmem:[%s3 + $0x8] sm:$0xff]
    %v65 = vld [vmem:[%s3 + $0x10] sm:$0xff]
    %v66 = vld [vmem:[%s3 + $0x18] sm:$0xff]
    %v67 = vld [vmem:[%s3 + $0x20] sm:$0xff]
    %v68 = vld [vmem:[%s3 + $0x28] sm:$0xff]
    %v69 = vld [vmem:[%s3 + $0x30] sm:$0xff]
    %v70 = vld [vmem:[%s3 + $0x38] sm:$0xff]
    %v71 = vld [vmem:[%s3 + $0x40] sm:$0xff]
    %v72 = vld [vmem:[%s3 + $0x48] sm:$0xff]
    %v73 = vld [vmem:[%s3 + $0x50] sm:$0xff]
    %v74 = vld [vmem:[%s3 + $0x58] sm:$0xff]
    %v75 = vld [vmem:[%s3 + $0x60] sm:$0xff]
    %v76 = vld [vmem:[%s3 + $0x68] sm:$0xff]
    %v77 = vld [vmem:[%s3 + $0x70] sm:$0xff]
    %v78 = vld [vmem:[%s3 + $0x78] sm:$0xff]
    %v79 = vld [vmem:[%s4] sm:$0x1]
    %v81 = vperm.slane %v79, 0
    %83 = vmatpush.msra.mxu0 %v78
    %84 = vmatpush.msra.mxu0 %v77
    %85 = vmatpush.msra.mxu0 %v76
    %86 = vmatpush.msra.mxu0 %v75
    %87 = vmatpush.msra.mxu0 %v74
    %88 = vmatpush.msra.mxu0 %v73
    %89 = vmatpush.msra.mxu0 %v72
    %90 = vmatpush.msra.mxu0 %v71
    %91 = vmatpush.msra.mxu0 %v70
    %92 = vmatpush.msra.mxu0 %v69
    %93 = vmatpush.msra.mxu0 %v68
    %94 = vmatpush.msra.mxu0 %v67
    %95 = vmatpush.msra.mxu0 %v66
    %96 = vmatpush.msra.mxu0 %v65
    %97 = vmatpush.msra.mxu0 %v64
    %98 = vmatpush.msra.mxu0 %v63
    %99 = vmatmul.f32.gmra.mxu0 %v61
    %v100 = vpop.f32.mrf.mxu0
    %v101 = vadd.f32 %v81, %v100
    %102 = vmatmul.f32.gmra.mxu0 %v62
    %v103 = vpop.f32.mrf.mxu0
    %v104 = vadd.f32 %v81, %v103
    %105 = vdwg.mxu0
    %106 = vst [vmem:[#allocation2] sm:$0xff] %v101
    %107 = vst [vmem:[#allocation2 + $0x8] sm:$0xff] %v104
    // Predicated region
    $region22: #{contrastive_pretext_decoder.1} parent=1 // pred_check
      _
    $region23: #{contrastive_pretext_decoder.1} parent=1 // pred_check_branch
      %109 = sbr.rel (0) target = $region25
    $region24: #{contrastive_pretext_decoder.1} parent=1 // pred_region
      %111 = vsyncadd [#allocation3], 0
      %s112 = sshll.u32 [#allocation2], 4
      %s113 = int_to_ptr.vmem [resolvable:$true] %s112
      %s114 = sshll.u32 %s5, 4
      %s115 = int_to_ptr.hbm [resolvable:$true] %s114
      %120 = dma.vmem_to_hbm [thread:$0]  %s113, 256, %s115, [#allocation3], 128, 128, 8
    $region25: #{contrastive_pretext_decoder.1} parent=1 // pred_fallthru
      _
    // Predicated region
    $region26: #{contrastive_pretext_decoder.1} parent=1 // pred_check
      _
    $region27: #{contrastive_pretext_decoder.1} parent=1 // pred_check_branch
      %122 = sbr.rel (0) target = $region29
    $region28: #{contrastive_pretext_decoder.1} parent=1 // pred_region
      %124 = dma.done [#allocation3], 256
    $region29: #{contrastive_pretext_decoder.1} parent=1 // pred_fallthru
      _
    %125 = vsyncpa [#allocation3], 1

</llo_original>
